<compile_context>
chip_gen: v7x
topology: tpu7x:2x2x1
jax: 0.10.0
libtpu: 0.0.40
codegen_flags: <defaults>
</compile_context>

<pallas_src>
import jax
import jax.numpy as jnp
from jax.experimental import pallas as pl
from jax.experimental.pallas import tpu as pltpu


def _sigmoid(v):
    return 1.0 / (1.0 + jnp.exp(-v))


def cbam_kernel(x_ref, w1t_ref, b1_ref, w2_ref, b2_ref, cw_ref, cb_ref, o_ref):
    # x_ref / o_ref: (1, C, H, W) VMEM block — one batch sample per grid step.
    # w1t_ref: (C, Cr)  fc1 weight transposed;  b1_ref: (1, Cr)
    # w2_ref : (C, Cr)  fc2 weight;             b2_ref: (C, 1)
    # cw_ref : (18,) SMEM  (conv_after_concat weights, [ci, ki, kj] flattened)
    # cb_ref : (1,)  SMEM  (conv bias)
    _, C, H, W = x_ref.shape
    inv_hw = 1.0 / float(H * W)
    inv_c = 1.0 / float(C)

    x = x_ref[0].astype(jnp.float32)                                  # (C, H, W)

    # ---------------- channel attention ----------------
    # global average / max pool over the spatial dims -> (C, 1)
    p_avg = jnp.sum(jnp.sum(x, axis=2), axis=1, keepdims=True) * inv_hw
    p_max = jnp.max(jnp.max(x, axis=2), axis=1, keepdims=True)

    w1t = w1t_ref[...].astype(jnp.float32)                            # (C, Cr)
    b1 = b1_ref[...].astype(jnp.float32)                              # (1, Cr)
    w2 = w2_ref[...].astype(jnp.float32)                              # (C, Cr)
    b2 = b2_ref[...].astype(jnp.float32)                              # (C, 1)

    def shared_mlp(p):                                                # p: (C, 1)
        h = jnp.sum(w1t * p, axis=0, keepdims=True) + b1              # (1, Cr) = fc1
        h = jnp.maximum(h, 0.0)                                       # ReLU
        return jnp.sum(w2 * h, axis=1, keepdims=True) + b2            # (C, 1) = fc2

    ch_att = _sigmoid(shared_mlp(p_avg) + shared_mlp(p_max))          # (C, 1)
    y = x * ch_att[:, :, None]                                        # (C, H, W)

    # ---------------- spatial attention ----------------
    avg_c = jnp.sum(y, axis=0) * inv_c                                # (H, W)
    max_c = jnp.max(y, axis=0)                                        # (H, W)

    # 3x3 cross-correlation (padding=1) over the 2-channel [avg, max] stack,
    # fully unrolled as 18 shifted multiply-adds on a zero-padded map.
    acc = jnp.zeros((H, W), jnp.float32) + cb_ref[0]
    for ci, m in enumerate((avg_c, max_c)):
        zr = jnp.zeros((1, W), jnp.float32)
        mp = jnp.concatenate([zr, m, zr], axis=0)                     # (H+2, W)
        zc = jnp.zeros((H + 2, 1), jnp.float32)
        mp = jnp.concatenate([zc, mp, zc], axis=1)                    # (H+2, W+2)
        for ki in range(3):
            for kj in range(3):
                wv = cw_ref[ci * 9 + ki * 3 + kj]
                acc = acc + wv * mp[ki:ki + H, kj:kj + W]
    sp_att = _sigmoid(acc)                                            # (H, W)

    o_ref[0] = (y * sp_att[None, :, :]).astype(o_ref.dtype)


def cbam_pallas(x, fc1_w, fc1_b, fc2_w, fc2_b, conv_w, conv_b):
    """x: (N, C, H, W). Weights in PyTorch Conv2d layouts:
       fc1_w (Cr, C, 1, 1), fc1_b (Cr,), fc2_w (C, Cr, 1, 1), fc2_b (C,),
       conv_w (1, 2, 3, 3), conv_b (1,)."""
    N, C, H, W = x.shape
    Cr = fc1_w.shape[0]

    w1t = jnp.transpose(fc1_w.reshape(Cr, C)).astype(jnp.float32)     # (C, Cr)
    b1 = fc1_b.reshape(1, Cr).astype(jnp.float32)                     # (1, Cr)
    w2 = fc2_w.reshape(C, Cr).astype(jnp.float32)                     # (C, Cr)
    b2 = fc2_b.reshape(C, 1).astype(jnp.float32)                      # (C, 1)
    cw = conv_w.reshape(-1).astype(jnp.float32)                       # (18,)
    cb = conv_b.reshape(-1).astype(jnp.float32)                       # (1,)

    return pl.pallas_call(
        cbam_kernel,
        grid=(N,),
        out_shape=jax.ShapeDtypeStruct((N, C, H, W), x.dtype),
        in_specs=[
            pl.BlockSpec((1, C, H, W), lambda n: (n, 0, 0, 0)),       # x (native dtype)
            pl.BlockSpec((C, Cr), lambda n: (0, 0)),                  # fc1 weight^T
            pl.BlockSpec((1, Cr), lambda n: (0, 0)),                  # fc1 bias
            pl.BlockSpec((C, Cr), lambda n: (0, 0)),                  # fc2 weight
            pl.BlockSpec((C, 1), lambda n: (0, 0)),                   # fc2 bias
            pl.BlockSpec(memory_space=pltpu.MemorySpace.SMEM),        # conv weights
            pl.BlockSpec(memory_space=pltpu.MemorySpace.SMEM),        # conv bias
        ],
        out_specs=pl.BlockSpec((1, C, H, W), lambda n: (n, 0, 0, 0)),
        compiler_params=pltpu.CompilerParams(
            dimension_semantics=("parallel",),
            vmem_limit_bytes=32 * 1024 * 1024,
        ),
    )(x, w1t, b1, w2, b2, cw, cb)


def cbam_reference(x, fc1_w, fc1_b, fc2_w, fc2_b, conv_w, conv_b):
    """Pure-JAX reference matching the PyTorch CBAM_Module forward."""
    x = x.astype(jnp.float32)

    def fc(p, w, b):  # p: (N, C_in, 1, 1), w: (C_out, C_in, 1, 1), b: (C_out,)
        return (jnp.einsum("nihw,oi->nohw", p, w[:, :, 0, 0])
                + b[None, :, None, None])

    avg = jnp.mean(x, axis=(2, 3), keepdims=True)
    mx = jnp.max(x, axis=(2, 3), keepdims=True)
    a = fc(jax.nn.relu(fc(avg, fc1_w, fc1_b)), fc2_w, fc2_b)
    m = fc(jax.nn.relu(fc(mx, fc1_w, fc1_b)), fc2_w, fc2_b)
    ch = jax.nn.sigmoid(a + m)
    y = x * ch

    avg_c = jnp.mean(y, axis=1, keepdims=True)
    max_c = jnp.max(y, axis=1, keepdims=True)
    cat = jnp.concatenate([avg_c, max_c], axis=1)                     # (N, 2, H, W)
    sp = jax.lax.conv_general_dilated(
        cat, conv_w, window_strides=(1, 1), padding="SAME",
        dimension_numbers=("NCHW", "OIHW", "NCHW"))
    sp = jax.nn.sigmoid(sp + conv_b[None, :, None, None])
    return (y * sp).astype(x.dtype)


if __name__ == "__main__":
    key = jax.random.PRNGKey(0)
    N, C, H, W = 2, 4, 16, 16
    reduction = 4
    Cr = max(C // reduction, 1)

    ks = jax.random.split(key, 7)
    x = jax.random.uniform(ks[0], (N, C, H, W), dtype=jnp.float32)
    fc1_w = jax.random.normal(ks[1], (Cr, C, 1, 1), jnp.float32) * 0.5
    fc1_b = jax.random.normal(ks[2], (Cr,), jnp.float32) * 0.1
    fc2_w = jax.random.normal(ks[3], (C, Cr, 1, 1), jnp.float32) * 0.5
    fc2_b = jax.random.normal(ks[4], (C,), jnp.float32) * 0.1
    conv_w = jax.random.normal(ks[5], (1, 2, 3, 3), jnp.float32) * 0.5
    conv_b = jax.random.normal(ks[6], (1,), jnp.float32) * 0.1

    y = cbam_pallas(x, fc1_w, fc1_b, fc2_w, fc2_b, conv_w, conv_b)
    jax.block_until_ready(y)

    y_ref = cbam_reference(x, fc1_w, fc1_b, fc2_w, fc2_b, conv_w, conv_b)
    assert y.shape == (N, C, H, W)
    max_err = jnp.max(jnp.abs(y - y_ref))
    assert jnp.allclose(y, y_ref, atol=1e-4, rtol=1e-4), f"max err {max_err}"

    print("KERNEL_OK")
</pallas_src>

<mosaic_0001>
module attributes {stable_mosaic.version = 11 : i64} {
  func.func @cbam_kernel(%arg0: i32, %arg1: memref<1x4x16x16xf32, #tpu.memory_space<vmem>>, %arg2: memref<4x1xf32, #tpu.memory_space<vmem>>, %arg3: memref<1x1xf32, #tpu.memory_space<vmem>>, %arg4: memref<4x1xf32, #tpu.memory_space<vmem>>, %arg5: memref<4x1xf32, #tpu.memory_space<vmem>>, %arg6: memref<18xf32, #tpu.memory_space<smem>>, %arg7: memref<1xf32, #tpu.memory_space<smem>>, %arg8: memref<1x4x16x16xf32, #tpu.memory_space<vmem>>) attributes {dimension_semantics = [#tpu.dimension_semantics<parallel>], iteration_bounds = array<i64: 2>, scalar_prefetch = 0 : i64, scratch_operands = 0 : i64, tpu.core_type = #tpu.core_type<tc>, window_params = [{transform_indices = @transform_0, window_bounds = array<i64: 1, 4, 16, 16>}, {pipeline_mode = #tpu.pipeline_mode<synchronous>, transform_indices = @transform_1, window_bounds = array<i64: 4, 1>}, {pipeline_mode = #tpu.pipeline_mode<synchronous>, transform_indices = @transform_2, window_bounds = array<i64: 1, 1>}, {pipeline_mode = #tpu.pipeline_mode<synchronous>, transform_indices = @transform_3, window_bounds = array<i64: 4, 1>}, {pipeline_mode = #tpu.pipeline_mode<synchronous>, transform_indices = @transform_4, window_bounds = array<i64: 4, 1>}, {transform_indices = @transform_5, window_bounds = array<i64: 18>}, {transform_indices = @transform_6, window_bounds = array<i64: 1>}, {transform_indices = @transform_7, window_bounds = array<i64: 1, 4, 16, 16>}]} {
    %c0 = arith.constant 0 : index
    %c0_0 = arith.constant 0 : index
    %c0_1 = arith.constant 0 : index
    %c0_2 = arith.constant 0 : index
    %0 = vector.load %arg1[%c0, %c0_0, %c0_1, %c0_2] : memref<1x4x16x16xf32, #tpu.memory_space<vmem>>, vector<1x4x16x16xf32>
    %1 = vector.shape_cast %0 : vector<1x4x16x16xf32> to vector<4x16x16xf32>
    %cst = arith.constant dense<0.000000e+00> : vector<4x16xf32>
    %2 = vector.multi_reduction <add>, %1, %cst [2] : vector<4x16x16xf32> to vector<4x16xf32>
    %cst_3 = arith.constant dense<0.000000e+00> : vector<4xf32>
    %3 = vector.multi_reduction <add>, %2, %cst_3 [1] : vector<4x16xf32> to vector<4xf32>
    %4 = vector.shape_cast %3 : vector<4xf32> to vector<4x1xf32>
    %cst_4 = arith.constant 3.906250e-03 : f32
    %5 = vector.broadcast %cst_4 : f32 to vector<4x1xf32>
    %6 = arith.mulf %4, %5 : vector<4x1xf32>
    %cst_5 = arith.constant dense<0xFF800000> : vector<4x16xf32>
    %7 = vector.multi_reduction <maximumf>, %1, %cst_5 [2] : vector<4x16x16xf32> to vector<4x16xf32>
    %cst_6 = arith.constant dense<0xFF800000> : vector<4xf32>
    %8 = vector.multi_reduction <maximumf>, %7, %cst_6 [1] : vector<4x16xf32> to vector<4xf32>
    %9 = vector.shape_cast %8 : vector<4xf32> to vector<4x1xf32>
    %c0_7 = arith.constant 0 : index
    %c0_8 = arith.constant 0 : index
    %10 = vector.load %arg2[%c0_7, %c0_8] : memref<4x1xf32, #tpu.memory_space<vmem>>, vector<4x1xf32>
    %c0_9 = arith.constant 0 : index
    %c0_10 = arith.constant 0 : index
    %11 = vector.load %arg3[%c0_9, %c0_10] : memref<1x1xf32, #tpu.memory_space<vmem>>, vector<1x1xf32>
    %c0_11 = arith.constant 0 : index
    %c0_12 = arith.constant 0 : index
    %12 = vector.load %arg4[%c0_11, %c0_12] : memref<4x1xf32, #tpu.memory_space<vmem>>, vector<4x1xf32>
    %c0_13 = arith.constant 0 : index
    %c0_14 = arith.constant 0 : index
    %13 = vector.load %arg5[%c0_13, %c0_14] : memref<4x1xf32, #tpu.memory_space<vmem>>, vector<4x1xf32>
    %14 = arith.mulf %10, %6 : vector<4x1xf32>
    %cst_15 = arith.constant dense<0.000000e+00> : vector<1xf32>
    %15 = vector.multi_reduction <add>, %14, %cst_15 [0] : vector<4x1xf32> to vector<1xf32>
    %16 = vector.shape_cast %15 : vector<1xf32> to vector<1x1xf32>
    %17 = arith.addf %16, %11 : vector<1x1xf32>
    %cst_16 = arith.constant 0.000000e+00 : f32
    %18 = vector.broadcast %cst_16 : f32 to vector<1x1xf32>
    %19 = arith.maximumf %17, %18 : vector<1x1xf32>
    %20 = vector.broadcast %19 : vector<1x1xf32> to vector<4x1xf32>
    %21 = arith.mulf %12, %20 : vector<4x1xf32>
    %cst_17 = arith.constant dense<0.000000e+00> : vector<4xf32>
    %22 = vector.multi_reduction <add>, %21, %cst_17 [1] : vector<4x1xf32> to vector<4xf32>
    %23 = vector.shape_cast %22 : vector<4xf32> to vector<4x1xf32>
    %24 = arith.addf %23, %13 : vector<4x1xf32>
    %25 = arith.mulf %10, %9 : vector<4x1xf32>
    %cst_18 = arith.constant dense<0.000000e+00> : vector<1xf32>
    %26 = vector.multi_reduction <add>, %25, %cst_18 [0] : vector<4x1xf32> to vector<1xf32>
    %27 = vector.shape_cast %26 : vector<1xf32> to vector<1x1xf32>
    %28 = arith.addf %27, %11 : vector<1x1xf32>
    %cst_19 = arith.constant 0.000000e+00 : f32
    %29 = vector.broadcast %cst_19 : f32 to vector<1x1xf32>
    %30 = arith.maximumf %28, %29 : vector<1x1xf32>
    %31 = vector.broadcast %30 : vector<1x1xf32> to vector<4x1xf32>
    %32 = arith.mulf %12, %31 : vector<4x1xf32>
    %cst_20 = arith.constant dense<0.000000e+00> : vector<4xf32>
    %33 = vector.multi_reduction <add>, %32, %cst_20 [1] : vector<4x1xf32> to vector<4xf32>
    %34 = vector.shape_cast %33 : vector<4xf32> to vector<4x1xf32>
    %35 = arith.addf %34, %13 : vector<4x1xf32>
    %36 = arith.addf %24, %35 : vector<4x1xf32>
    %cst_21 = arith.constant 0.000000e+00 : f32
    %37 = vector.broadcast %cst_21 : f32 to vector<4x1xf32>
    %38 = arith.subf %37, %36 : vector<4x1xf32>
    %39 = math.exp %38 : vector<4x1xf32>
    %cst_22 = arith.constant 1.000000e+00 : f32
    %40 = vector.broadcast %cst_22 : f32 to vector<4x1xf32>
    %41 = arith.addf %40, %39 : vector<4x1xf32>
    %cst_23 = arith.constant 1.000000e+00 : f32
    %42 = vector.broadcast %cst_23 : f32 to vector<4x1xf32>
    %43 = arith.divf %42, %41 : vector<4x1xf32>
    %44 = vector.shape_cast %43 : vector<4x1xf32> to vector<4x1x1xf32>
    %45 = vector.broadcast %44 : vector<4x1x1xf32> to vector<4x16x16xf32>
    %46 = arith.mulf %1, %45 : vector<4x16x16xf32>
    %cst_24 = arith.constant dense<0.000000e+00> : vector<16x16xf32>
    %47 = vector.multi_reduction <add>, %46, %cst_24 [0] : vector<4x16x16xf32> to vector<16x16xf32>
    %cst_25 = arith.constant 2.500000e-01 : f32
    %48 = vector.broadcast %cst_25 : f32 to vector<16x16xf32>
    %49 = arith.mulf %47, %48 : vector<16x16xf32>
    %cst_26 = arith.constant dense<0xFF800000> : vector<16x16xf32>
    %50 = vector.multi_reduction <maximumf>, %46, %cst_26 [0] : vector<4x16x16xf32> to vector<16x16xf32>
    %cst_27 = arith.constant 0.000000e+00 : f32
    %51 = vector.broadcast %cst_27 : f32 to vector<16x16xf32>
    %c0_28 = arith.constant 0 : index
    %52 = memref.load %arg7[%c0_28] : memref<1xf32, #tpu.memory_space<smem>>
    %53 = vector.broadcast %52 : f32 to vector<16x16xf32>
    %54 = arith.addf %51, %53 : vector<16x16xf32>
    %cst_29 = arith.constant 0.000000e+00 : f32
    %55 = vector.broadcast %cst_29 : f32 to vector<1x16xf32>
    %56 = tpu.concatenate %55, %49, %55 in 0 : vector<1x16xf32>, vector<16x16xf32>, vector<1x16xf32> -> vector<18x16xf32>
    %cst_30 = arith.constant 0.000000e+00 : f32
    %57 = vector.broadcast %cst_30 : f32 to vector<18x1xf32>
    %58 = tpu.concatenate %57, %56, %57 in 1 : vector<18x1xf32>, vector<18x16xf32>, vector<18x1xf32> -> vector<18x18xf32>
    %c0_31 = arith.constant 0 : index
    %59 = memref.load %arg6[%c0_31] : memref<18xf32, #tpu.memory_space<smem>>
    %60 = vector.extract_strided_slice %58 {offsets = [0, 0], sizes = [16, 16], strides = [1, 1]} : vector<18x18xf32> to vector<16x16xf32>
    %61 = vector.broadcast %59 : f32 to vector<16x16xf32>
    %62 = arith.mulf %61, %60 : vector<16x16xf32>
    %63 = arith.addf %54, %62 : vector<16x16xf32>
    %c1 = arith.constant 1 : index
    %64 = memref.load %arg6[%c1] : memref<18xf32, #tpu.memory_space<smem>>
    %65 = vector.extract_strided_slice %58 {offsets = [0, 1], sizes = [16, 16], strides = [1, 1]} : vector<18x18xf32> to vector<16x16xf32>
    %66 = vector.broadcast %64 : f32 to vector<16x16xf32>
    %67 = arith.mulf %66, %65 : vector<16x16xf32>
    %68 = arith.addf %63, %67 : vector<16x16xf32>
    %c2 = arith.constant 2 : index
    %69 = memref.load %arg6[%c2] : memref<18xf32, #tpu.memory_space<smem>>
    %70 = vector.extract_strided_slice %58 {offsets = [0, 2], sizes = [16, 16], strides = [1, 1]} : vector<18x18xf32> to vector<16x16xf32>
    %71 = vector.broadcast %69 : f32 to vector<16x16xf32>
    %72 = arith.mulf %71, %70 : vector<16x16xf32>
    %73 = arith.addf %68, %72 : vector<16x16xf32>
    %c3 = arith.constant 3 : index
    %74 = memref.load %arg6[%c3] : memref<18xf32, #tpu.memory_space<smem>>
    %75 = vector.extract_strided_slice %58 {offsets = [1, 0], sizes = [16, 16], strides = [1, 1]} : vector<18x18xf32> to vector<16x16xf32>
    %76 = vector.broadcast %74 : f32 to vector<16x16xf32>
    %77 = arith.mulf %76, %75 : vector<16x16xf32>
    %78 = arith.addf %73, %77 : vector<16x16xf32>
    %c4 = arith.constant 4 : index
    %79 = memref.load %arg6[%c4] : memref<18xf32, #tpu.memory_space<smem>>
    %80 = vector.extract_strided_slice %58 {offsets = [1, 1], sizes = [16, 16], strides = [1, 1]} : vector<18x18xf32> to vector<16x16xf32>
    %81 = vector.broadcast %79 : f32 to vector<16x16xf32>
    %82 = arith.mulf %81, %80 : vector<16x16xf32>
    %83 = arith.addf %78, %82 : vector<16x16xf32>
    %c5 = arith.constant 5 : index
    %84 = memref.load %arg6[%c5] : memref<18xf32, #tpu.memory_space<smem>>
    %85 = vector.extract_strided_slice %58 {offsets = [1, 2], sizes = [16, 16], strides = [1, 1]} : vector<18x18xf32> to vector<16x16xf32>
    %86 = vector.broadcast %84 : f32 to vector<16x16xf32>
    %87 = arith.mulf %86, %85 : vector<16x16xf32>
    %88 = arith.addf %83, %87 : vector<16x16xf32>
    %c6 = arith.constant 6 : index
    %89 = memref.load %arg6[%c6] : memref<18xf32, #tpu.memory_space<smem>>
    %90 = vector.extract_strided_slice %58 {offsets = [2, 0], sizes = [16, 16], strides = [1, 1]} : vector<18x18xf32> to vector<16x16xf32>
    %91 = vector.broadcast %89 : f32 to vector<16x16xf32>
    %92 = arith.mulf %91, %90 : vector<16x16xf32>
    %93 = arith.addf %88, %92 : vector<16x16xf32>
    %c7 = arith.constant 7 : index
    %94 = memref.load %arg6[%c7] : memref<18xf32, #tpu.memory_space<smem>>
    %95 = vector.extract_strided_slice %58 {offsets = [2, 1], sizes = [16, 16], strides = [1, 1]} : vector<18x18xf32> to vector<16x16xf32>
    %96 = vector.broadcast %94 : f32 to vector<16x16xf32>
    %97 = arith.mulf %96, %95 : vector<16x16xf32>
    %98 = arith.addf %93, %97 : vector<16x16xf32>
    %c8 = arith.constant 8 : index
    %99 = memref.load %arg6[%c8] : memref<18xf32, #tpu.memory_space<smem>>
    %100 = vector.extract_strided_slice %58 {offsets = [2, 2], sizes = [16, 16], strides = [1, 1]} : vector<18x18xf32> to vector<16x16xf32>
    %101 = vector.broadcast %99 : f32 to vector<16x16xf32>
    %102 = arith.mulf %101, %100 : vector<16x16xf32>
    %103 = arith.addf %98, %102 : vector<16x16xf32>
    %cst_32 = arith.constant 0.000000e+00 : f32
    %104 = vector.broadcast %cst_32 : f32 to vector<1x16xf32>
    %105 = tpu.concatenate %104, %50, %104 in 0 : vector<1x16xf32>, vector<16x16xf32>, vector<1x16xf32> -> vector<18x16xf32>
    %cst_33 = arith.constant 0.000000e+00 : f32
    %106 = vector.broadcast %cst_33 : f32 to vector<18x1xf32>
    %107 = tpu.concatenate %106, %105, %106 in 1 : vector<18x1xf32>, vector<18x16xf32>, vector<18x1xf32> -> vector<18x18xf32>
    %c9 = arith.constant 9 : index
    %108 = memref.load %arg6[%c9] : memref<18xf32, #tpu.memory_space<smem>>
    %109 = vector.extract_strided_slice %107 {offsets = [0, 0], sizes = [16, 16], strides = [1, 1]} : vector<18x18xf32> to vector<16x16xf32>
    %110 = vector.broadcast %108 : f32 to vector<16x16xf32>
    %111 = arith.mulf %110, %109 : vector<16x16xf32>
    %112 = arith.addf %103, %111 : vector<16x16xf32>
    %c10 = arith.constant 10 : index
    %113 = memref.load %arg6[%c10] : memref<18xf32, #tpu.memory_space<smem>>
    %114 = vector.extract_strided_slice %107 {offsets = [0, 1], sizes = [16, 16], strides = [1, 1]} : vector<18x18xf32> to vector<16x16xf32>
    %115 = vector.broadcast %113 : f32 to vector<16x16xf32>
    %116 = arith.mulf %115, %114 : vector<16x16xf32>
    %117 = arith.addf %112, %116 : vector<16x16xf32>
    %c11 = arith.constant 11 : index
    %118 = memref.load %arg6[%c11] : memref<18xf32, #tpu.memory_space<smem>>
    %119 = vector.extract_strided_slice %107 {offsets = [0, 2], sizes = [16, 16], strides = [1, 1]} : vector<18x18xf32> to vector<16x16xf32>
    %120 = vector.broadcast %118 : f32 to vector<16x16xf32>
    %121 = arith.mulf %120, %119 : vector<16x16xf32>
    %122 = arith.addf %117, %121 : vector<16x16xf32>
    %c12 = arith.constant 12 : index
    %123 = memref.load %arg6[%c12] : memref<18xf32, #tpu.memory_space<smem>>
    %124 = vector.extract_strided_slice %107 {offsets = [1, 0], sizes = [16, 16], strides = [1, 1]} : vector<18x18xf32> to vector<16x16xf32>
    %125 = vector.broadcast %123 : f32 to vector<16x16xf32>
    %126 = arith.mulf %125, %124 : vector<16x16xf32>
    %127 = arith.addf %122, %126 : vector<16x16xf32>
    %c13 = arith.constant 13 : index
    %128 = memref.load %arg6[%c13] : memref<18xf32, #tpu.memory_space<smem>>
    %129 = vector.extract_strided_slice %107 {offsets = [1, 1], sizes = [16, 16], strides = [1, 1]} : vector<18x18xf32> to vector<16x16xf32>
    %130 = vector.broadcast %128 : f32 to vector<16x16xf32>
    %131 = arith.mulf %130, %129 : vector<16x16xf32>
    %132 = arith.addf %127, %131 : vector<16x16xf32>
    %c14 = arith.constant 14 : index
    %133 = memref.load %arg6[%c14] : memref<18xf32, #tpu.memory_space<smem>>
    %134 = vector.extract_strided_slice %107 {offsets = [1, 2], sizes = [16, 16], strides = [1, 1]} : vector<18x18xf32> to vector<16x16xf32>
    %135 = vector.broadcast %133 : f32 to vector<16x16xf32>
    %136 = arith.mulf %135, %134 : vector<16x16xf32>
    %137 = arith.addf %132, %136 : vector<16x16xf32>
    %c15 = arith.constant 15 : index
    %138 = memref.load %arg6[%c15] : memref<18xf32, #tpu.memory_space<smem>>
    %139 = vector.extract_strided_slice %107 {offsets = [2, 0], sizes = [16, 16], strides = [1, 1]} : vector<18x18xf32> to vector<16x16xf32>
    %140 = vector.broadcast %138 : f32 to vector<16x16xf32>
    %141 = arith.mulf %140, %139 : vector<16x16xf32>
    %142 = arith.addf %137, %141 : vector<16x16xf32>
    %c16 = arith.constant 16 : index
    %143 = memref.load %arg6[%c16] : memref<18xf32, #tpu.memory_space<smem>>
    %144 = vector.extract_strided_slice %107 {offsets = [2, 1], sizes = [16, 16], strides = [1, 1]} : vector<18x18xf32> to vector<16x16xf32>
    %145 = vector.broadcast %143 : f32 to vector<16x16xf32>
    %146 = arith.mulf %145, %144 : vector<16x16xf32>
    %147 = arith.addf %142, %146 : vector<16x16xf32>
    %c17 = arith.constant 17 : index
    %148 = memref.load %arg6[%c17] : memref<18xf32, #tpu.memory_space<smem>>
    %149 = vector.extract_strided_slice %107 {offsets = [2, 2], sizes = [16, 16], strides = [1, 1]} : vector<18x18xf32> to vector<16x16xf32>
    %150 = vector.broadcast %148 : f32 to vector<16x16xf32>
    %151 = arith.mulf %150, %149 : vector<16x16xf32>
    %152 = arith.addf %147, %151 : vector<16x16xf32>
    %cst_34 = arith.constant 0.000000e+00 : f32
    %153 = vector.broadcast %cst_34 : f32 to vector<16x16xf32>
    %154 = arith.subf %153, %152 : vector<16x16xf32>
    %155 = math.exp %154 : vector<16x16xf32>
    %cst_35 = arith.constant 1.000000e+00 : f32
    %156 = vector.broadcast %cst_35 : f32 to vector<16x16xf32>
    %157 = arith.addf %156, %155 : vector<16x16xf32>
    %cst_36 = arith.constant 1.000000e+00 : f32
    %158 = vector.broadcast %cst_36 : f32 to vector<16x16xf32>
    %159 = arith.divf %158, %157 : vector<16x16xf32>
    %160 = vector.shape_cast %159 : vector<16x16xf32> to vector<1x16x16xf32>
    %161 = vector.broadcast %160 : vector<1x16x16xf32> to vector<4x16x16xf32>
    %162 = arith.mulf %46, %161 : vector<4x16x16xf32>
    %c0_37 = arith.constant 0 : index
    %c0_38 = arith.constant 0 : index
    %c0_39 = arith.constant 0 : index
    %c0_40 = arith.constant 0 : index
    %163 = vector.load %arg8[%c0_37, %c0_38, %c0_39, %c0_40] : memref<1x4x16x16xf32, #tpu.memory_space<vmem>>, vector<1x4x16x16xf32>
    %164 = vector.shape_cast %163 : vector<1x4x16x16xf32> to vector<4x16x16xf32>
    %165 = vector.shape_cast %162 : vector<4x16x16xf32> to vector<1x4x16x16xf32>
    tpu.vector_store %arg8[%c0_37, %c0_38, %c0_39, %c0_40], %165 {strides = array<i32>} : memref<1x4x16x16xf32, #tpu.memory_space<vmem>>, vector<1x4x16x16xf32>,
    return
  }
  func.func @transform_0(%arg0: i32) -> (i32, i32, i32, i32) {
    %c0_i32 = arith.constant 0 : i32
    %c0_i32_0 = arith.constant 0 : i32
    %c0_i32_1 = arith.constant 0 : i32
    %c0_i32_2 = arith.constant 0 : i32
    return %arg0, %c0_i32, %c0_i32_0, %c0_i32_1 : i32, i32, i32, i32
  }
  func.func @transform_1(%arg0: i32) -> (i32, i32) {
    %c0_i32 = arith.constant 0 : i32
    %c0_i32_0 = arith.constant 0 : i32
    %c0_i32_1 = arith.constant 0 : i32
    return %c0_i32, %c0_i32_0 : i32, i32
  }
  func.func @transform_2(%arg0: i32) -> (i32, i32) {
    %c0_i32 = arith.constant 0 : i32
    %c0_i32_0 = arith.constant 0 : i32
    %c0_i32_1 = arith.constant 0 : i32
    return %c0_i32, %c0_i32_0 : i32, i32
  }
  func.func @transform_3(%arg0: i32) -> (i32, i32) {
    %c0_i32 = arith.constant 0 : i32
    %c0_i32_0 = arith.constant 0 : i32
    %c0_i32_1 = arith.constant 0 : i32
    return %c0_i32, %c0_i32_0 : i32, i32
  }
  func.func @transform_4(%arg0: i32) -> (i32, i32) {
    %c0_i32 = arith.constant 0 : i32
    %c0_i32_0 = arith.constant 0 : i32
    %c0_i32_1 = arith.constant 0 : i32
    return %c0_i32, %c0_i32_0 : i32, i32
  }
  func.func @transform_5(%arg0: i32) -> i32 {
    %c0_i32 = arith.constant 0 : i32
    %c0_i32_0 = arith.constant 0 : i32
    return %c0_i32 : i32
  }
  func.func @transform_6(%arg0: i32) -> i32 {
    %c0_i32 = arith.constant 0 : i32
    %c0_i32_0 = arith.constant 0 : i32
    return %c0_i32 : i32
  }
  func.func @transform_7(%arg0: i32) -> (i32, i32, i32, i32) {
    %c0_i32 = arith.constant 0 : i32
    %c0_i32_0 = arith.constant 0 : i32
    %c0_i32_1 = arith.constant 0 : i32
    %c0_i32_2 = arith.constant 0 : i32
    return %arg0, %c0_i32, %c0_i32_0, %c0_i32_1 : i32, i32, i32, i32
  }
}

</mosaic_0001>

<llo_original>
// kernel: tpu_custom_call.1
$region0: #{tpu_custom_call.1}
  #allocation0 [shape = 'u32[]', space=smem, size = 0x4, offset = 0x4, fixed_abs, tag = 'smem constant byte address 0x4 - core index']
  #allocation1 [shape = 'u32[144,128]{1,0:T(1,128)}', space=vmem, size = 0x12000, scoped, tag = 'internal scratch']
  #allocation2 [shape = 'f32[1,1]{1,0:T(1,128)S(1)}', space=vmem, size = 0x200, scoped, tag = 'scoped memory for tpu_custom_call.1']
  #allocation3 [shape = 'f32[1]{0:T(128)S(6)}', space=smem, size = 0x200, scoped, tag = 'scoped memory for tpu_custom_call.1']
  %s0 = inlined_call_operand.hbm [shape: f32[2,4,16,16], index: 0, kind: input, shape index: {}]
  %s1 = inlined_call_operand.vmem [shape: f32[4,1], index: 1, kind: input, shape index: {}]
  %s2 = inlined_call_operand.<no memory space> [shape: f32[1,1], index: 2, kind: input, shape index: {}]
  %s3 = inlined_call_operand.vmem [shape: f32[4,1], index: 3, kind: input, shape index: {}]
  %s4 = inlined_call_operand.vmem [shape: f32[4,1], index: 4, kind: input, shape index: {}]
  %s5 = inlined_call_operand.vmem [shape: f32[18], index: 5, kind: input, shape index: {}]
  %s6 = inlined_call_operand.<no memory space> [shape: f32[1], index: 6, kind: input, shape index: {}]
  %s7 = inlined_call_operand.hbm [shape: f32[2,4,16,16], index: 7, kind: output, shape index: {}]
  %s8 = sld [smem:[#allocation0]]
  $region69: #{tpu_custom_call.1} parent=0
    _
  %s10 = ssub.s32 1, %s8
  %s11 = scalar_select 0, %s10, %s8
  %v12 = vstv %s2
  %13 = vst [vmem:[#allocation2] sm:$0x1] %v12
  %14 = sst [smem:[#allocation3]] %s6
  $region1: #{tpu_custom_call.1} parent=0
    #allocation4 [shape = 'u8[65536]{0}', space=vmem, size = 0x10000, scoped, tag = 'input window, operand 0']
    #allocation5 [shape = 's32[2]{0}', space=sflag, size = 0x8, scoped, tag = 'scoped memory for tpu_custom_call.1']
    #allocation6 [shape = 's32[2]{0}', space=sflag, size = 0x8, scoped, tag = 'scoped memory for tpu_custom_call.1']
    #allocation7 [shape = 's32[2]{0}', space=sflag, size = 0x8, scoped, tag = 'scoped memory for tpu_custom_call.1']
    #allocation8 [shape = 'u8[512]{0}', space=smem, size = 0x200, scoped, tag = 'input window, operand 5, single buffered']
    #allocation9 [shape = 'u8[65536]{0}', space=vmem, size = 0x10000, scoped, tag = 'output window, operand 0']
    %15 = vsyncpa [#allocation5], 0
    %s16 = scalar_lea.sflag [#allocation5], 1
    %17 = vsyncpa %s16, 0
    %18 = vsyncpa [#allocation7], 0
    %19 = vsyncpa [#allocation6], 0
    %s20 = scalar_lea.sflag [#allocation6], 1
    %21 = vsyncpa %s20, 0
    loop: start=0, step=1, limit=4
    $region2: #{tpu_custom_call.1} parent=1 // loop_pre_header
      _
    $region3: #{tpu_custom_call.1} parent=1 // loop_header
      %s23 = sphi 0, %s27
      %p24 = scmp.ge.s32.totalorder %s23, 4
      %s33 = sphi 0, %s35
      %s36 = sphi 0, %s33
      %s37 = sphi 0, %s36
      %s53 = sphi 0, %s37
      %s57 = sphi 0, %s57
      %s59 = sphi 0, %s57
      %s60 = sphi 0, %s59
      %s74 = sphi 0, %s60
      %s78 = sphi 0, %s78
      %s80 = sphi 0, %s78
      %s81 = sphi 0, %s80
      %s95 = sphi 0, %s81
      %s99 = sphi 0, %s99
      %s101 = sphi 0, %s99
      %s102 = sphi 0, %s101
      %s116 = sphi 0, %s102
      %s120 = sphi 0, %s120
      %s122 = sphi 0, %s120
      %s123 = sphi 0, %s122
      %s137 = sphi 0, %s123
      %s141 = sphi 0, %s141
      %s143 = sphi 0, %s141
      %s144 = sphi 0, %s143
      %s158 = sphi 0, %s144
      %s162 = sphi 0, %s162
      %s164 = sphi 0, %s162
      %s165 = sphi 0, %s164
      %s179 = sphi 0, %s165
      %s185 = sphi 0, %s187
      %s188 = sphi 0, %s185
      %s189 = sphi 0, %s188
      %s205 = sphi 0, %s189
    $region4: #{tpu_custom_call.1} parent=1 // loop_header_branch
      %26 = sbr.rel (%p24) target = $region8
    $region5: #{tpu_custom_call.1} parent=1 // loop_body
      %s28 = ssub.s32 %s23, 1
      %s29 = ssub.s32 %s23, 2
      %s30 = sadd.s32 %s23, 1
      %s31 = ssub.s32 %s23, %s30
      %p32 = scmp.eq.s32.totalorder %s31, 0
      %s34 = sadd.s32 %s33, 1
      %s35 = scalar_select %p32, %s33, %s34
      %p38 = pneg %p32
      %p39 = scmp.eq.s32.totalorder %s23, 1
      %p40 = por %p38, %p39
      %p41 = scmp.ne.s32.totalorder %s33, %s36
      %p42 = scmp.eq.s32.totalorder %s23, 0
      %p43 = por %p41, %p42
      %p44 = scmp.ne.s32.totalorder %s33, %s36
      %p45 = scmp.eq.s32.totalorder %s28, 1
      %p46 = por %p44, %p45
      %p47 = scmp.ne.s32.totalorder %s36, %s37
      %p48 = scmp.eq.s32.totalorder %s28, 0
      %p49 = por %p47, %p48
      %p50 = scmp.ne.s32.totalorder %s36, %s37
      %p51 = scmp.eq.s32.totalorder %s29, 1
      %p52 = por %p50, %p51
      %p54 = scmp.ne.s32.totalorder %s37, %s53
      %p55 = scmp.eq.s32.totalorder %s29, 0
      %p56 = por %p54, %p55
      %s58 = sadd.s32 %s57, 1
      %p61 = scmp.eq.s32.totalorder %s23, 1
      %p62 = scmp.ne.s32.totalorder %s57, %s59
      %p63 = scmp.eq.s32.totalorder %s23, 0
      %p64 = por %p62, %p63
      %p65 = scmp.ne.s32.totalorder %s57, %s59
      %p66 = scmp.eq.s32.totalorder %s28, 1
      %p67 = por %p65, %p66
      %p68 = scmp.ne.s32.totalorder %s59, %s60
      %p69 = scmp.eq.s32.totalorder %s28, 0
      %p70 = por %p68, %p69
      %p71 = scmp.ne.s32.totalorder %s59, %s60
      %p72 = scmp.eq.s32.totalorder %s29, 1
      %p73 = por %p71, %p72
      %p75 = scmp.ne.s32.totalorder %s60, %s74
      %p76 = scmp.eq.s32.totalorder %s29, 0
      %p77 = por %p75, %p76
      %s79 = sadd.s32 %s78, 1
      %p82 = scmp.eq.s32.totalorder %s23, 1
      %p83 = scmp.ne.s32.totalorder %s78, %s80
      %p84 = scmp.eq.s32.totalorder %s23, 0
      %p85 = por %p83, %p84
      %p86 = scmp.ne.s32.totalorder %s78, %s80
      %p87 = scmp.eq.s32.totalorder %s28, 1
      %p88 = por %p86, %p87
      %p89 = scmp.ne.s32.totalorder %s80, %s81
      %p90 = scmp.eq.s32.totalorder %s28, 0
      %p91 = por %p89, %p90
      %p92 = scmp.ne.s32.totalorder %s80, %s81
      %p93 = scmp.eq.s32.totalorder %s29, 1
      %p94 = por %p92, %p93
      %p96 = scmp.ne.s32.totalorder %s81, %s95
      %p97 = scmp.eq.s32.totalorder %s29, 0
      %p98 = por %p96, %p97
      %s100 = sadd.s32 %s99, 1
      %p103 = scmp.eq.s32.totalorder %s23, 1
      %p104 = scmp.ne.s32.totalorder %s99, %s101
      %p105 = scmp.eq.s32.totalorder %s23, 0
      %p106 = por %p104, %p105
      %p107 = scmp.ne.s32.totalorder %s99, %s101
      %p108 = scmp.eq.s32.totalorder %s28, 1
      %p109 = por %p107, %p108
      %p110 = scmp.ne.s32.totalorder %s101, %s102
      %p111 = scmp.eq.s32.totalorder %s28, 0
      %p112 = por %p110, %p111
      %p113 = scmp.ne.s32.totalorder %s101, %s102
      %p114 = scmp.eq.s32.totalorder %s29, 1
      %p115 = por %p113, %p114
      %p117 = scmp.ne.s32.totalorder %s102, %s116
      %p118 = scmp.eq.s32.totalorder %s29, 0
      %p119 = por %p117, %p118
      %s121 = sadd.s32 %s120, 1
      %p124 = scmp.eq.s32.totalorder %s23, 1
      %p125 = scmp.ne.s32.totalorder %s120, %s122
      %p126 = scmp.eq.s32.totalorder %s23, 0
      %p127 = por %p125, %p126
      %p128 = scmp.ne.s32.totalorder %s120, %s122
      %p129 = scmp.eq.s32.totalorder %s28, 1
      %p130 = por %p128, %p129
      %p131 = scmp.ne.s32.totalorder %s122, %s123
      %p132 = scmp.eq.s32.totalorder %s28, 0
      %p133 = por %p131, %p132
      %p134 = scmp.ne.s32.totalorder %s122, %s123
      %p135 = scmp.eq.s32.totalorder %s29, 1
      %p136 = por %p134, %p135
      %p138 = scmp.ne.s32.totalorder %s123, %s137
      %p139 = scmp.eq.s32.totalorder %s29, 0
      %p140 = por %p138, %p139
      %s142 = sadd.s32 %s141, 1
      %p145 = scmp.eq.s32.totalorder %s23, 1
      %p146 = scmp.ne.s32.totalorder %s141, %s143
      %p147 = scmp.eq.s32.totalorder %s23, 0
      %p148 = por %p146, %p147
      %p149 = scmp.ne.s32.totalorder %s141, %s143
      %p150 = scmp.eq.s32.totalorder %s28, 1
      %p151 = por %p149, %p150
      %p152 = scmp.ne.s32.totalorder %s143, %s144
      %p153 = scmp.eq.s32.totalorder %s28, 0
      %p154 = por %p152, %p153
      %p155 = scmp.ne.s32.totalorder %s143, %s144
      %p156 = scmp.eq.s32.totalorder %s29, 1
      %p157 = por %p155, %p156
      %p159 = scmp.ne.s32.totalorder %s144, %s158
      %p160 = scmp.eq.s32.totalorder %s29, 0
      %p161 = por %p159, %p160
      %s163 = sadd.s32 %s162, 1
      %p166 = scmp.eq.s32.totalorder %s23, 1
      %p167 = scmp.ne.s32.totalorder %s162, %s164
      %p168 = scmp.eq.s32.totalorder %s23, 0
      %p169 = por %p167, %p168
      %p170 = scmp.ne.s32.totalorder %s162, %s164
      %p171 = scmp.eq.s32.totalorder %s28, 1
      %p172 = por %p170, %p171
      %p173 = scmp.ne.s32.totalorder %s164, %s165
      %p174 = scmp.eq.s32.totalorder %s28, 0
      %p175 = por %p173, %p174
      %p176 = scmp.ne.s32.totalorder %s164, %s165
      %p177 = scmp.eq.s32.totalorder %s29, 1
      %p178 = por %p176, %p177
      %p180 = scmp.ne.s32.totalorder %s165, %s179
      %p181 = scmp.eq.s32.totalorder %s29, 0
      %p182 = por %p180, %p181
      %s183 = ssub.s32 %s23, %s30
      %p184 = scmp.eq.s32.totalorder %s183, 0
      %s186 = sadd.s32 %s185, 1
      %s187 = scalar_select %p184, %s185, %s186
      %p190 = pneg %p184
      %p191 = scmp.eq.s32.totalorder %s23, 1
      %p192 = por %p190, %p191
      %p193 = scmp.ne.s32.totalorder %s185, %s188
      %p194 = scmp.eq.s32.totalorder %s23, 0
      %p195 = por %p193, %p194
      %p196 = scmp.ne.s32.totalorder %s185, %s188
      %p197 = scmp.eq.s32.totalorder %s28, 1
      %p198 = por %p196, %p197
      %p199 = scmp.ne.s32.totalorder %s188, %s189
      %p200 = scmp.eq.s32.totalorder %s28, 0
      %p201 = por %p199, %p200
      %p202 = scmp.ne.s32.totalorder %s188, %s189
      %p203 = scmp.eq.s32.totalorder %s29, 1
      %p204 = por %p202, %p203
      %p206 = scmp.ne.s32.totalorder %s189, %s205
      %p207 = scmp.eq.s32.totalorder %s29, 0
      %p208 = por %p206, %p207
      %p209 = scmp.le.s32.totalorder 1, %s23
      %p210 = scmp.lt.s32.totalorder %s23, 3
      %p211 = pnand %p209, %p210
      %p212 = pneg %p211
      // Predicated region
      $region9: #{tpu_custom_call.1} parent=5 // pred_check
        _
      $region10: #{tpu_custom_call.1} parent=5 // pred_check_branch
        %214 = sbr.rel (%p211) target = $region12
      $region11: #{tpu_custom_call.1} parent=5 // pred_region
        %s215 = ssub.s32 %s23, 1
        // Predicated region
        $region13: #{tpu_custom_call.1} parent=11 // pred_check
          %p216 = pneg %p70
        $region14: #{tpu_custom_call.1} parent=11 // pred_check_branch
          %218 = sbr.rel (%p216) target = $region16
        $region15: #{tpu_custom_call.1} parent=11 // pred_region
          _
        $region16: #{tpu_custom_call.1} parent=11 // pred_fallthru
          _
        // Predicated region
        $region17: #{tpu_custom_call.1} parent=11 // pred_check
          %p219 = pneg %p91
        $region18: #{tpu_custom_call.1} parent=11 // pred_check_branch
          %221 = sbr.rel (%p219) target = $region20
        $region19: #{tpu_custom_call.1} parent=11 // pred_region
          _
        $region20: #{tpu_custom_call.1} parent=11 // pred_fallthru
          _
        // Predicated region
        $region21: #{tpu_custom_call.1} parent=11 // pred_check
          %p222 = pneg %p112
        $region22: #{tpu_custom_call.1} parent=11 // pred_check_branch
          %224 = sbr.rel (%p222) target = $region24
        $region23: #{tpu_custom_call.1} parent=11 // pred_region
          _
        $region24: #{tpu_custom_call.1} parent=11 // pred_fallthru
          _
        // Predicated region
        $region25: #{tpu_custom_call.1} parent=11 // pred_check
          %p225 = pneg %p133
        $region26: #{tpu_custom_call.1} parent=11 // pred_check_branch
          %227 = sbr.rel (%p225) target = $region28
        $region27: #{tpu_custom_call.1} parent=11 // pred_region
          _
        $region28: #{tpu_custom_call.1} parent=11 // pred_fallthru
          _
        // Predicated region
        $region29: #{tpu_custom_call.1} parent=11 // pred_check
          %p228 = pneg %p154
        $region30: #{tpu_custom_call.1} parent=11 // pred_check_branch
          %230 = sbr.rel (%p228) target = $region32
        $region31: #{tpu_custom_call.1} parent=11 // pred_region
          %s232 = ssub.s32 16, 16
          %233 = vsyncadd [#allocation7], %s232
          %s235 = sshll.u32 %s5, 4
          %s236 = int_to_ptr.vmem [resolvable:$true] %s235
          %238 = dma.vmem_to_smem %s236, 16, [#allocation8], [#allocation7]
        $region32: #{tpu_custom_call.1} parent=11 // pred_fallthru
          _
        // Predicated region
        $region33: #{tpu_custom_call.1} parent=11 // pred_check
          %p239 = pneg %p175
        $region34: #{tpu_custom_call.1} parent=11 // pred_check_branch
          %241 = sbr.rel (%p239) target = $region36
        $region35: #{tpu_custom_call.1} parent=11 // pred_region
          _
        $region36: #{tpu_custom_call.1} parent=11 // pred_fallthru
          _
      $region12: #{tpu_custom_call.1} parent=5 // pred_fallthru
        _
      %p242 = scmp.lt.s32.totalorder %s23, 2
      // Predicated region
      $region37: #{tpu_custom_call.1} parent=5 // pred_check
        %p243 = pneg %p242
      $region38: #{tpu_custom_call.1} parent=5 // pred_check_branch
        %245 = sbr.rel (%p243) target = $region40
      $region39: #{tpu_custom_call.1} parent=5 // pred_region
        // Predicated region
        $region41: #{tpu_custom_call.1} parent=39 // pred_check
          %p246 = pneg %p43
        $region42: #{tpu_custom_call.1} parent=39 // pred_check_branch
          %248 = sbr.rel (%p246) target = $region44
        $region43: #{tpu_custom_call.1} parent=39 // pred_region
          %s249 = sand.u32 %s33, 1
          %s250 = scalar_lea.sflag [#allocation5], %s249
          %s251 = sand.u32 %s33, 1
          %s252 = smul.addr %s251, 64
          %s253 = scalar_lea.vmem [#allocation4], %s252
          %s255 = ssub.s32 1024, 1024
          %256 = vsyncadd %s250, %s255
          %s257 = smul.addr %s23, 8
          %s258 = smul.addr %s257, 128
          %s259 = scalar_lea.hbm %s0, %s258
          %s260 = sshll.u32 %s253, 4
          %s261 = int_to_ptr.vmem [resolvable:$true] %s260
          %266 = dma.hbm_to_vmem [thread:$0]  %s259, 1024, %s261, %s250, 128, 128, 8
        $region44: #{tpu_custom_call.1} parent=39 // pred_fallthru
          _
      $region40: #{tpu_custom_call.1} parent=5 // pred_fallthru
        _
      %p267 = scmp.le.s32.totalorder 1, %s23
      %p268 = scmp.lt.s32.totalorder %s23, 3
      %p269 = pnand %p267, %p268
      %p270 = pneg %p269
      // Predicated region
      $region45: #{tpu_custom_call.1} parent=5 // pred_check
        _
      $region46: #{tpu_custom_call.1} parent=5 // pred_check_branch
        %272 = sbr.rel (%p269) target = $region48
      $region47: #{tpu_custom_call.1} parent=5 // pred_region
        %s273 = ssub.s32 %s23, 1
        %s274 = sand.u32 %s36, 1
        %s275 = scalar_lea.sflag [#allocation5], %s274
        %s276 = sand.u32 %s36, 1
        %s277 = smul.addr %s276, 64
        %s278 = scalar_lea.vmem [#allocation4], %s277
        // Predicated region
        $region49: #{tpu_custom_call.1} parent=47 // pred_check
          %p279 = pneg %p49
        $region50: #{tpu_custom_call.1} parent=47 // pred_check_branch
          %281 = sbr.rel (%p279) target = $region52
        $region51: #{tpu_custom_call.1} parent=47 // pred_region
          %282 = dma.done %s275, 1024
        $region52: #{tpu_custom_call.1} parent=47 // pred_fallthru
          _
        // Predicated region
        $region53: #{tpu_custom_call.1} parent=47 // pred_check
          %p283 = pneg %p154
        $region54: #{tpu_custom_call.1} parent=47 // pred_check_branch
          %285 = sbr.rel (%p283) target = $region56
        $region55: #{tpu_custom_call.1} parent=47 // pred_region
          %286 = dma.done [#allocation7], 16
        $region56: #{tpu_custom_call.1} parent=47 // pred_fallthru
          _
        %287 = sfence
        %s288 = sand.u32 %s36, 1
        %s289 = scalar_lea.sflag [#allocation5], %s288
        %s290 = sand.u32 %s36, 1
        %s291 = smul.addr %s290, 64
        %s292 = scalar_lea.vmem [#allocation4], %s291
        %p293 = pneg %p49
        %p294 = pneg %p46
        %p295 = pneg %p70
        %p296 = pneg %p67
        %p297 = pneg %p91
        %p298 = pneg %p88
        %p299 = pneg %p112
        %p300 = pneg %p109
        %p301 = pneg %p133
        %p302 = pneg %p130
        %p303 = pneg %p154
        %p304 = pneg %p151
        %p305 = pneg %p175
        %p306 = pneg %p172
        %p307 = pneg %p201
        %p308 = pneg %p198
        %s309 = sand.u32 %s188, 1
        %s310 = scalar_lea.sflag [#allocation6], %s309
        %s311 = sand.u32 %s188, 1
        %s312 = smul.addr %s311, 64
        %s313 = scalar_lea.vmem [#allocation9], %s312
        %v314 = vld [vmem:[%s278] sm:$0xff]
        %v315 = vld [vmem:[%s278 + $0x8] sm:$0xff]
        %v316 = vld [vmem:[%s278 + $0x10] sm:$0xff]
        %v317 = vld [vmem:[%s278 + $0x18] sm:$0xff]
        %v318 = vld [vmem:[%s278 + $0x20] sm:$0xff]
        %v319 = vld [vmem:[%s278 + $0x28] sm:$0xff]
        %v320 = vld [vmem:[%s278 + $0x30] sm:$0xff]
        %v321 = vld [vmem:[%s278 + $0x38] sm:$0xff]
        %vm322 = vcmask 130048
        %v323 = vsel %vm322, %v314, 0.0
        %324 = vadd.xlane.f32.xlu0 %v323
        %v325 = vpop.xlane.xlu0 %324
        %v326 = vsel %vm322, %v315, 0.0
        %327 = vadd.xlane.f32.xlu0 %v326
        %v328 = vpop.xlane.xlu0 %327
        %v329 = vsel %vm322, %v316, 0.0
        %330 = vadd.xlane.f32.xlu0 %v329
        %v331 = vpop.xlane.xlu0 %330
        %v332 = vsel %vm322, %v317, 0.0
        %333 = vadd.xlane.f32.xlu0 %v332
        %v334 = vpop.xlane.xlu0 %333
        %v335 = vsel %vm322, %v318, 0.0
        %336 = vadd.xlane.f32.xlu0 %v335
        %v337 = vpop.xlane.xlu0 %336
        %v338 = vsel %vm322, %v319, 0.0
        %339 = vadd.xlane.f32.xlu0 %v338
        %v340 = vpop.xlane.xlu0 %339
        %v341 = vsel %vm322, %v320, 0.0
        %342 = vadd.xlane.f32.xlu0 %v341
        %v343 = vpop.xlane.xlu0 %342
        %v344 = vsel %vm322, %v321, 0.0
        %345 = vadd.xlane.f32.xlu0 %v344
        %v346 = vpop.xlane.xlu0 %345
        %v355 = vlaneseq
        %v356 = vand.u32 %v355, 127
        %v357 = vlaneseq
        %v358 = vshrl.u32 %v357, 7
        %v359 = vsub.s32 %v356, %v358
        %v360 = vrot.slane %v325, %v359
        %v361 = vadd.s32 %v356, 4294967288
        %v362 = vlaneseq
        %v363 = vshrl.u32 %v362, 7
        %v364 = vsub.s32 %v361, %v363
        %v365 = vrot.slane %v328, %v364
        %vm366 = vcmask 130112
        %v367 = vsel %vm366, %v365, %v360
        %v368 = vlaneseq
        %v369 = vshrl.u32 %v368, 7
        %v370 = vsub.s32 %v356, %v369
        %v371 = vrot.slane %v331, %v370
        %v372 = vlaneseq
        %v373 = vshrl.u32 %v372, 7
        %v374 = vsub.s32 %v361, %v373
        %v375 = vrot.slane %v334, %v374
        %v376 = vsel %vm366, %v375, %v371
        %v377 = vlaneseq
        %v378 = vshrl.u32 %v377, 7
        %v379 = vsub.s32 %v356, %v378
        %v380 = vrot.slane %v337, %v379
        %v381 = vlaneseq
        %v382 = vshrl.u32 %v381, 7
        %v383 = vsub.s32 %v361, %v382
        %v384 = vrot.slane %v340, %v383
        %v385 = vsel %vm366, %v384, %v380
        %v386 = vlaneseq
        %v387 = vshrl.u32 %v386, 7
        %v388 = vsub.s32 %v356, %v387
        %v389 = vrot.slane %v343, %v388
        %v390 = vlaneseq
        %v391 = vshrl.u32 %v390, 7
        %v392 = vsub.s32 %v361, %v391
        %v393 = vrot.slane %v346, %v392
        %v394 = vsel %vm366, %v393, %v389
        %vm395 = vcmask 1041409
        %v396 = vsel %vm395, %v376, %v367
        %vm397 = vcmask 1042434
        %v398 = vsel %vm397, %v385, %v396
        %vm399 = vcmask 1043459
        %v400 = vsel %vm399, %v394, %v398
        %vm402 = vcmask 125952
        %v403 = vsel %vm402, %v400, 0.0
        %404 = vadd.xlane.f32.xlu0 %v403
        %v405 = vpop.xlane.xlu0 %404
        %v406 = vmul.f32 %v405, 0.00390625
        %v407 = vsel %vm322, %v314, -inf
        %408 = vmax.xlane.f32.xlu0 %v407
        %v409 = vpop.xlane.xlu0 %408
        %v410 = vsel %vm322, %v315, -inf
        %411 = vmax.xlane.f32.xlu0 %v410
        %v412 = vpop.xlane.xlu0 %411
        %v413 = vsel %vm322, %v316, -inf
        %414 = vmax.xlane.f32.xlu0 %v413
        %v415 = vpop.xlane.xlu0 %414
        %v416 = vsel %vm322, %v317, -inf
        %417 = vmax.xlane.f32.xlu0 %v416
        %v418 = vpop.xlane.xlu0 %417
        %v419 = vsel %vm322, %v318, -inf
        %420 = vmax.xlane.f32.xlu0 %v419
        %v421 = vpop.xlane.xlu0 %420
        %v422 = vsel %vm322, %v319, -inf
        %423 = vmax.xlane.f32.xlu0 %v422
        %v424 = vpop.xlane.xlu0 %423
        %v425 = vsel %vm322, %v320, -inf
        %426 = vmax.xlane.f32.xlu0 %v425
        %v427 = vpop.xlane.xlu0 %426
        %v428 = vsel %vm322, %v321, -inf
        %429 = vmax.xlane.f32.xlu0 %v428
        %v430 = vpop.xlane.xlu0 %429
        %v439 = vlaneseq
        %v440 = vshrl.u32 %v439, 7
        %v441 = vsub.s32 %v356, %v440
        %v442 = vrot.slane %v409, %v441
        %v443 = vlaneseq
        %v444 = vshrl.u32 %v443, 7
        %v445 = vsub.s32 %v361, %v444
        %v446 = vrot.slane %v412, %v445
        %v447 = vsel %vm366, %v446, %v442
        %v448 = vlaneseq
        %v449 = vshrl.u32 %v448, 7
        %v450 = vsub.s32 %v356, %v449
        %v451 = vrot.slane %v415, %v450
        %v452 = vlaneseq
        %v453 = vshrl.u32 %v452, 7
        %v454 = vsub.s32 %v361, %v453
        %v455 = vrot.slane %v418, %v454
        %v456 = vsel %vm366, %v455, %v451
        %v457 = vlaneseq
        %v458 = vshrl.u32 %v457, 7
        %v459 = vsub.s32 %v356, %v458
        %v460 = vrot.slane %v421, %v459
        %v461 = vlaneseq
        %v462 = vshrl.u32 %v461, 7
        %v463 = vsub.s32 %v361, %v462
        %v464 = vrot.slane %v424, %v463
        %v465 = vsel %vm366, %v464, %v460
        %v466 = vlaneseq
        %v467 = vshrl.u32 %v466, 7
        %v468 = vsub.s32 %v356, %v467
        %v469 = vrot.slane %v427, %v468
        %v470 = vlaneseq
        %v471 = vshrl.u32 %v470, 7
        %v472 = vsub.s32 %v361, %v471
        %v473 = vrot.slane %v430, %v472
        %v474 = vsel %vm366, %v473, %v469
        %v475 = vsel %vm395, %v456, %v447
        %v476 = vsel %vm397, %v465, %v475
        %v477 = vsel %vm399, %v474, %v476
        %v479 = vsel %vm402, %v477, -inf
        %480 = vmax.xlane.f32.xlu0 %v479
        %v481 = vpop.xlane.xlu0 %480
        %v482 = vld [vmem:[%s1] sm:$0xf]
        %v483 = vld [vmem:[#allocation2] sm:$0x1]
        %v484 = vld [vmem:[%s3] sm:$0xf]
        %v485 = vld [vmem:[%s4] sm:$0xf]
        %v486 = vmul.f32 %v482, %v406
        %vm487 = vcmask 3072
        %v488 = vsel %vm487, %v486, 0.0
        %v489 = vrot.slane %v488, 4
        %v490 = vadd.f32 %v488, %v489
        %v491 = vrot.slane %v490, 2
        %v492 = vadd.f32 %v490, %v491
        %v493 = vrot.slane %v492, 1
        %v494 = vadd.f32 %v492, %v493
        %v495 = vadd.f32 %v494, %v483
        %v496 = vmax.f32 %v495, 0.0
        %v497 = vlaneseq
        %v498 = vshrl.u32 %v497, 7
        %v499 = vsub.s32 0, %v498
        %v500 = vrot.slane %v496, %v499
        %v501 = vmul.f32 %v484, %v500
        %v502 = vadd.f32 %v501, 0.0
        %v503 = vadd.f32 %v502, %v485
        %v504 = vmul.f32 %v482, %v481
        %v505 = vsel %vm487, %v504, 0.0
        %v506 = vrot.slane %v505, 4
        %v507 = vadd.f32 %v505, %v506
        %v508 = vrot.slane %v507, 2
        %v509 = vadd.f32 %v507, %v508
        %v510 = vrot.slane %v509, 1
        %v511 = vadd.f32 %v509, %v510
        %v512 = vadd.f32 %v511, %v483
        %v513 = vmax.f32 %v512, 0.0
        %v514 = vlaneseq
        %v515 = vshrl.u32 %v514, 7
        %v516 = vsub.s32 0, %v515
        %v517 = vrot.slane %v513, %v516
        %v518 = vmul.f32 %v484, %v517
        %v519 = vadd.f32 %v518, 0.0
        %v520 = vadd.f32 %v519, %v485
        %v521 = vadd.f32 %v503, %v520
        %v522 = vsub.f32 0.0, %v521
        %v523 = vmul.f32 %v522, 1.442695
        %v524 = vpow.pop %v523
        %v525 = vadd.f32 %v524, 1.0
        %v526 = vrcp.pop %v525
        %v527 = vmul.f32 1.0, %v526
        %v530 = vunpack.c.l.s4 1966171168
        %v531 = vunpack.c.0.s8 %v530
        %v532 = vlaneseq
        %v533 = vshrl.u32 %v532, 7
        %v534 = vsub.s32 %v531, %v533
        %v535 = vrot.slane %v527, %v534
        %v536 = vcombine.high %v535, %v535
        %v538 = vunpack.c.l.s4 1966171168
        %v539 = vunpack.c.0.s8 %v538
        %v540 = vlaneseq
        %v541 = vshrl.u32 %v540, 7
        %v542 = vsub.s32 %v539, %v541
        %v543 = vrot.slane %v535, %v542
        %v545 = vunpack.c.l.s4 1966171168
        %v546 = vunpack.c.0.s8 %v545
        %v547 = vlaneseq
        %v548 = vshrl.u32 %v547, 7
        %v549 = vsub.s32 %v546, %v548
        %v550 = vrot.slane %v536, %v549
        %v551 = vcombine.high %v543, %v543
        %v552 = vcombine.high %v550, %v550
        %v553 = vlaneseq
        %v554 = vshrl.u32 %v553, 7
        %v555 = vsub.s32 0, %v554
        %v556 = vrot.slane %v543, %v555
        %v557 = vlaneseq
        %v558 = vshrl.u32 %v557, 7
        %v559 = vsub.s32 0, %v558
        %v560 = vrot.slane %v550, %v559
        %v561 = vlaneseq
        %v562 = vshrl.u32 %v561, 7
        %v563 = vsub.s32 0, %v562
        %v564 = vrot.slane %v551, %v563
        %v565 = vlaneseq
        %v566 = vshrl.u32 %v565, 7
        %v567 = vsub.s32 0, %v566
        %v568 = vrot.slane %v552, %v567
        %569 = vset.pattern.permute.xlu0 0
        %570 = vperm.xlu0 %569, %v556
        %v571 = vpop.permute.xlu0 %570
        %573 = vset.pattern.permute.xlu0 0
        %574 = vperm.xlu0 %573, %v560
        %v575 = vpop.permute.xlu0 %574
        %577 = vset.pattern.permute.xlu0 0
        %578 = vperm.xlu0 %577, %v564
        %v579 = vpop.permute.xlu0 %578
        %581 = vset.pattern.permute.xlu0 0
        %582 = vperm.xlu0 %581, %v568
        %v583 = vpop.permute.xlu0 %582
        %v585 = vmul.f32 %v314, %v571
        %v586 = vmul.f32 %v315, %v571
        %v587 = vmul.f32 %v316, %v575
        %v588 = vmul.f32 %v317, %v575
        %v589 = vmul.f32 %v318, %v579
        %v590 = vmul.f32 %v319, %v579
        %v591 = vmul.f32 %v320, %v583
        %v592 = vmul.f32 %v321, %v583
        %v593 = vsel %vm322, %v585, 0.0
        %v594 = vsel %vm322, %v587, 0.0
        %v595 = vadd.f32 %v593, %v594
        %v596 = vsel %vm322, %v589, 0.0
        %v597 = vadd.f32 %v595, %v596
        %v598 = vsel %vm322, %v591, 0.0
        %v599 = vadd.f32 %v597, %v598
        %v600 = vsel %vm322, %v586, 0.0
        %v601 = vsel %vm322, %v588, 0.0
        %v602 = vadd.f32 %v600, %v601
        %v603 = vsel %vm322, %v590, 0.0
        %v604 = vadd.f32 %v602, %v603
        %v605 = vsel %vm322, %v592, 0.0
        %v606 = vadd.f32 %v604, %v605
        %v607 = vmul.f32 %v599, 0.25
        %v608 = vmul.f32 %v606, 0.25
        %v609 = vsel %vm322, %v585, -inf
        %v610 = vsel %vm322, %v587, -inf
        %v611 = vsel %vm322, %v589, -inf
        %v612 = vmax.f32 %v609, %v611
        %v613 = vsel %vm322, %v591, -inf
        %v614 = vmax.f32 %v610, %v613
        %v615 = vmax.f32 %v612, %v614
        %v616 = vsel %vm322, %v586, -inf
        %v617 = vsel %vm322, %v588, -inf
        %v618 = vsel %vm322, %v590, -inf
        %v619 = vmax.f32 %v616, %v618
        %v620 = vsel %vm322, %v592, -inf
        %v621 = vmax.f32 %v617, %v620
        %v622 = vmax.f32 %v619, %v621
        %s623 = sld [smem:[#allocation3]]
        %v624 = vstv %s623
        %v625 = vadd.f32 %v624, 0.0
        %vm628 = vcmask 1040384
        %v629 = vrot.slane %v607, 7
        %v630 = vrot.slane %v608, 7
        %v631 = vsel %vm628, %v629, %v630
        %v634 = vsel %vm628, 0.0, %v629
        %v635 = vsel %vm628, %v630, 0.0
        %638 = vrot.lane.b32.xlu0 %v634, 1
        %v639 = vpop.permute.xlu0 %638
        %640 = vrot.lane.b32.xlu0 %v631, 1
        %v641 = vpop.permute.xlu0 %640
        %642 = vrot.lane.b32.xlu0 %v635, 1
        %v643 = vpop.permute.xlu0 %642
        %vm647 = vcmask 7168
        %v648 = vsel %vm647, 0.0, %v639
        %v649 = vsel %vm647, 0.0, %v641
        %v650 = vsel %vm647, 0.0, %v643
        %vm651 = vcmask 138240
        %v652 = vsel %vm651, %v648, 0.0
        %v653 = vsel %vm651, %v649, 0.0
        %v654 = vsel %vm651, %v650, 0.0
        %s655 = sld [smem:[#allocation8]]
        %v656 = vstv %s655
        %v657 = vmul.f32 %v656, %v652
        %v658 = vmul.f32 %v656, %v653
        %v659 = vadd.f32 %v625, %v657
        %v660 = vadd.f32 %v625, %v658
        %s661 = sld [smem:[#allocation8 + $0x1]]
        %v662 = vstv %s661
        %v663 = vmul.f32 %v662, %v652
        %v664 = vmul.f32 %v662, %v653
        %667 = vrot.lane.b32.xlu0 %v663, 127
        %v668 = vpop.permute.xlu0 %667
        %669 = vrot.lane.b32.xlu0 %v664, 127
        %v670 = vpop.permute.xlu0 %669
        %v673 = vadd.f32 %v659, %v668
        %v674 = vadd.f32 %v660, %v670
        %s675 = sld [smem:[#allocation8 + $0x2]]
        %v676 = vstv %s675
        %v677 = vmul.f32 %v676, %v652
        %v678 = vmul.f32 %v676, %v653
        %681 = vrot.lane.b32.xlu0 %v677, 126
        %v682 = vpop.permute.xlu0 %681
        %683 = vrot.lane.b32.xlu0 %v678, 126
        %v684 = vpop.permute.xlu0 %683
        %v687 = vadd.f32 %v673, %v682
        %v688 = vadd.f32 %v674, %v684
        %s689 = sld [smem:[#allocation8 + $0x3]]
        %v690 = vstv %s689
        %v691 = vmul.f32 %v690, %v652
        %v692 = vmul.f32 %v690, %v653
        %v693 = vmul.f32 %v690, %v654
        %vm697 = vcmask 1046528
        %v698 = vrot.slane %v691, 1
        %v699 = vrot.slane %v692, 1
        %v700 = vsel %vm697, %v698, %v699
        %v701 = vrot.slane %v693, 1
        %v702 = vsel %vm697, %v699, %v701
        %v705 = vadd.f32 %v687, %v700
        %v706 = vadd.f32 %v688, %v702
        %s707 = sld [smem:[#allocation8 + $0x4]]
        %v708 = vstv %s707
        %v709 = vmul.f32 %v708, %v652
        %v710 = vmul.f32 %v708, %v653
        %v711 = vmul.f32 %v708, %v654
        %v715 = vrot.slane %v709, 1
        %v716 = vrot.slane %v710, 1
        %v717 = vsel %vm697, %v715, %v716
        %v718 = vrot.slane %v711, 1
        %v719 = vsel %vm697, %v716, %v718
        %720 = vrot.lane.b32.xlu0 %v717, 127
        %v721 = vpop.permute.xlu0 %720
        %722 = vrot.lane.b32.xlu0 %v719, 127
        %v723 = vpop.permute.xlu0 %722
        %v726 = vadd.f32 %v705, %v721
        %v727 = vadd.f32 %v706, %v723
        %s728 = sld [smem:[#allocation8 + $0x5]]
        %v729 = vstv %s728
        %v730 = vmul.f32 %v729, %v652
        %v731 = vmul.f32 %v729, %v653
        %v732 = vmul.f32 %v729, %v654
        %v736 = vrot.slane %v730, 1
        %v737 = vrot.slane %v731, 1
        %v738 = vsel %vm697, %v736, %v737
        %v739 = vrot.slane %v732, 1
        %v740 = vsel %vm697, %v737, %v739
        %741 = vrot.lane.b32.xlu0 %v738, 126
        %v742 = vpop.permute.xlu0 %741
        %743 = vrot.lane.b32.xlu0 %v740, 126
        %v744 = vpop.permute.xlu0 %743
        %v747 = vadd.f32 %v726, %v742
        %v748 = vadd.f32 %v727, %v744
        %s749 = sld [smem:[#allocation8 + $0x6]]
        %v750 = vstv %s749
        %v751 = vmul.f32 %v750, %v652
        %v752 = vmul.f32 %v750, %v653
        %v753 = vmul.f32 %v750, %v654
        %vm757 = vcmask 1045504
        %v758 = vrot.slane %v751, 2
        %v759 = vrot.slane %v752, 2
        %v760 = vsel %vm757, %v758, %v759
        %v761 = vrot.slane %v753, 2
        %v762 = vsel %vm757, %v759, %v761
        %v765 = vadd.f32 %v747, %v760
        %v766 = vadd.f32 %v748, %v762
        %s767 = sld [smem:[#allocation8 + $0x7]]
        %v768 = vstv %s767
        %v769 = vmul.f32 %v768, %v652
        %v770 = vmul.f32 %v768, %v653
        %v771 = vmul.f32 %v768, %v654
        %v775 = vrot.slane %v769, 2
        %v776 = vrot.slane %v770, 2
        %v777 = vsel %vm757, %v775, %v776
        %v778 = vrot.slane %v771, 2
        %v779 = vsel %vm757, %v776, %v778
        %780 = vrot.lane.b32.xlu0 %v777, 127
        %v781 = vpop.permute.xlu0 %780
        %782 = vrot.lane.b32.xlu0 %v779, 127
        %v783 = vpop.permute.xlu0 %782
        %v786 = vadd.f32 %v765, %v781
        %v787 = vadd.f32 %v766, %v783
        %s788 = sld [smem:[#allocation8 + $0x8]]
        %v789 = vstv %s788
        %v790 = vmul.f32 %v789, %v652
        %v791 = vmul.f32 %v789, %v653
        %v792 = vmul.f32 %v789, %v654
        %v796 = vrot.slane %v790, 2
        %v797 = vrot.slane %v791, 2
        %v798 = vsel %vm757, %v796, %v797
        %v799 = vrot.slane %v792, 2
        %v800 = vsel %vm757, %v797, %v799
        %801 = vrot.lane.b32.xlu0 %v798, 126
        %v802 = vpop.permute.xlu0 %801
        %803 = vrot.lane.b32.xlu0 %v800, 126
        %v804 = vpop.permute.xlu0 %803
        %v807 = vadd.f32 %v786, %v802
        %v808 = vadd.f32 %v787, %v804
        %v811 = vrot.slane %v615, 7
        %v812 = vrot.slane %v622, 7
        %v813 = vsel %vm628, %v811, %v812
        %v816 = vsel %vm628, 0.0, %v811
        %v817 = vsel %vm628, %v812, 0.0
        %820 = vrot.lane.b32.xlu0 %v816, 1
        %v821 = vpop.permute.xlu0 %820
        %822 = vrot.lane.b32.xlu0 %v813, 1
        %v823 = vpop.permute.xlu0 %822
        %824 = vrot.lane.b32.xlu0 %v817, 1
        %v825 = vpop.permute.xlu0 %824
        %v829 = vsel %vm647, 0.0, %v821
        %v830 = vsel %vm647, 0.0, %v823
        %v831 = vsel %vm647, 0.0, %v825
        %v832 = vsel %vm651, %v829, 0.0
        %v833 = vsel %vm651, %v830, 0.0
        %v834 = vsel %vm651, %v831, 0.0
        %s835 = sld [smem:[#allocation8 + $0x9]]
        %v836 = vstv %s835
        %v837 = vmul.f32 %v836, %v832
        %v838 = vmul.f32 %v836, %v833
        %v839 = vadd.f32 %v807, %v837
        %v840 = vadd.f32 %v808, %v838
        %s841 = sld [smem:[#allocation8 + $0xa]]
        %v842 = vstv %s841
        %v843 = vmul.f32 %v842, %v832
        %v844 = vmul.f32 %v842, %v833
        %847 = vrot.lane.b32.xlu0 %v843, 127
        %v848 = vpop.permute.xlu0 %847
        %849 = vrot.lane.b32.xlu0 %v844, 127
        %v850 = vpop.permute.xlu0 %849
        %v853 = vadd.f32 %v839, %v848
        %v854 = vadd.f32 %v840, %v850
        %s855 = sld [smem:[#allocation8 + $0xb]]
        %v856 = vstv %s855
        %v857 = vmul.f32 %v856, %v832
        %v858 = vmul.f32 %v856, %v833
        %861 = vrot.lane.b32.xlu0 %v857, 126
        %v862 = vpop.permute.xlu0 %861
        %863 = vrot.lane.b32.xlu0 %v858, 126
        %v864 = vpop.permute.xlu0 %863
        %v867 = vadd.f32 %v853, %v862
        %v868 = vadd.f32 %v854, %v864
        %s869 = sld [smem:[#allocation8 + $0xc]]
        %v870 = vstv %s869
        %v871 = vmul.f32 %v870, %v832
        %v872 = vmul.f32 %v870, %v833
        %v873 = vmul.f32 %v870, %v834
        %v877 = vrot.slane %v871, 1
        %v878 = vrot.slane %v872, 1
        %v879 = vsel %vm697, %v877, %v878
        %v880 = vrot.slane %v873, 1
        %v881 = vsel %vm697, %v878, %v880
        %v884 = vadd.f32 %v867, %v879
        %v885 = vadd.f32 %v868, %v881
        %s886 = sld [smem:[#allocation8 + $0xd]]
        %v887 = vstv %s886
        %v888 = vmul.f32 %v887, %v832
        %v889 = vmul.f32 %v887, %v833
        %v890 = vmul.f32 %v887, %v834
        %v894 = vrot.slane %v888, 1
        %v895 = vrot.slane %v889, 1
        %v896 = vsel %vm697, %v894, %v895
        %v897 = vrot.slane %v890, 1
        %v898 = vsel %vm697, %v895, %v897
        %899 = vrot.lane.b32.xlu0 %v896, 127
        %v900 = vpop.permute.xlu0 %899
        %901 = vrot.lane.b32.xlu0 %v898, 127
        %v902 = vpop.permute.xlu0 %901
        %v905 = vadd.f32 %v884, %v900
        %v906 = vadd.f32 %v885, %v902
        %s907 = sld [smem:[#allocation8 + $0xe]]
        %v908 = vstv %s907
        %v909 = vmul.f32 %v908, %v832
        %v910 = vmul.f32 %v908, %v833
        %v911 = vmul.f32 %v908, %v834
        %v915 = vrot.slane %v909, 1
        %v916 = vrot.slane %v910, 1
        %v917 = vsel %vm697, %v915, %v916
        %v918 = vrot.slane %v911, 1
        %v919 = vsel %vm697, %v916, %v918
        %920 = vrot.lane.b32.xlu0 %v917, 126
        %v921 = vpop.permute.xlu0 %920
        %922 = vrot.lane.b32.xlu0 %v919, 126
        %v923 = vpop.permute.xlu0 %922
        %v926 = vadd.f32 %v905, %v921
        %v927 = vadd.f32 %v906, %v923
        %s928 = sld [smem:[#allocation8 + $0xf]]
        %v929 = vstv %s928
        %v930 = vmul.f32 %v929, %v832
        %v931 = vmul.f32 %v929, %v833
        %v932 = vmul.f32 %v929, %v834
        %v936 = vrot.slane %v930, 2
        %v937 = vrot.slane %v931, 2
        %v938 = vsel %vm757, %v936, %v937
        %v939 = vrot.slane %v932, 2
        %v940 = vsel %vm757, %v937, %v939
        %v943 = vadd.f32 %v926, %v938
        %v944 = vadd.f32 %v927, %v940
        %s945 = sld [smem:[#allocation8 + $0x10]]
        %v946 = vstv %s945
        %v947 = vmul.f32 %v946, %v832
        %v948 = vmul.f32 %v946, %v833
        %v949 = vmul.f32 %v946, %v834
        %v953 = vrot.slane %v947, 2
        %v954 = vrot.slane %v948, 2
        %v955 = vsel %vm757, %v953, %v954
        %v956 = vrot.slane %v949, 2
        %v957 = vsel %vm757, %v954, %v956
        %958 = vrot.lane.b32.xlu0 %v955, 127
        %v959 = vpop.permute.xlu0 %958
        %960 = vrot.lane.b32.xlu0 %v957, 127
        %v961 = vpop.permute.xlu0 %960
        %v964 = vadd.f32 %v943, %v959
        %v965 = vadd.f32 %v944, %v961
        %s966 = sld [smem:[#allocation8 + $0x11]]
        %v967 = vstv %s966
        %v968 = vmul.f32 %v967, %v832
        %v969 = vmul.f32 %v967, %v833
        %v970 = vmul.f32 %v967, %v834
        %v974 = vrot.slane %v968, 2
        %v975 = vrot.slane %v969, 2
        %v976 = vsel %vm757, %v974, %v975
        %v977 = vrot.slane %v970, 2
        %v978 = vsel %vm757, %v975, %v977
        %979 = vrot.lane.b32.xlu0 %v976, 126
        %v980 = vpop.permute.xlu0 %979
        %981 = vrot.lane.b32.xlu0 %v978, 126
        %v982 = vpop.permute.xlu0 %981
        %v985 = vadd.f32 %v964, %v980
        %v986 = vadd.f32 %v965, %v982
        %v987 = vsub.f32 0.0, %v985
        %v988 = vsub.f32 0.0, %v986
        %v989 = vmul.f32 %v987, 1.442695
        %v990 = vpow.pop %v989
        %v991 = vmul.f32 %v988, 1.442695
        %v992 = vpow.pop %v991
        %v993 = vadd.f32 %v990, 1.0
        %v994 = vadd.f32 %v992, 1.0
        %v995 = vrcp.pop %v993
        %v996 = vmul.f32 1.0, %v995
        %v997 = vrcp.pop %v994
        %v998 = vmul.f32 1.0, %v997
        %v999 = vmul.f32 %v585, %v996
        %v1000 = vmul.f32 %v586, %v998
        %v1001 = vmul.f32 %v587, %v996
        %v1002 = vmul.f32 %v588, %v998
        %v1003 = vmul.f32 %v589, %v996
        %v1004 = vmul.f32 %v590, %v998
        %v1005 = vmul.f32 %v591, %v996
        %v1006 = vmul.f32 %v592, %v998
        %1007 = vst.msk [vmem:[%s313] sm:$0xff] %vm322, %v999
        %1008 = vst.msk [vmem:[%s313 + $0x8] sm:$0xff] %vm322, %v1000
        %1009 = vst.msk [vmem:[%s313 + $0x10] sm:$0xff] %vm322, %v1001
        %1010 = vst.msk [vmem:[%s313 + $0x18] sm:$0xff] %vm322, %v1002
        %1011 = vst.msk [vmem:[%s313 + $0x20] sm:$0xff] %vm322, %v1003
        %1012 = vst.msk [vmem:[%s313 + $0x28] sm:$0xff] %vm322, %v1004
        %1013 = vst.msk [vmem:[%s313 + $0x30] sm:$0xff] %vm322, %v1005
        %1014 = vst.msk [vmem:[%s313 + $0x38] sm:$0xff] %vm322, %v1006
        %s1015 = sand.u32 %s188, 1
        %s1016 = scalar_lea.sflag [#allocation6], %s1015
        %s1017 = sand.u32 %s188, 1
        %s1018 = smul.addr %s1017, 64
        %s1019 = scalar_lea.vmem [#allocation9], %s1018
        // Predicated region
        $region57: #{tpu_custom_call.1} parent=47 // pred_check
          %p1020 = pneg %p198
        $region58: #{tpu_custom_call.1} parent=47 // pred_check_branch
          %1022 = sbr.rel (%p1020) target = $region60
        $region59: #{tpu_custom_call.1} parent=47 // pred_region
          %s1024 = ssub.s32 1024, 1024
          %1025 = vsyncadd %s1016, %s1024
          %s1026 = smul.addr %s28, 8
          %s1027 = smul.addr %s1026, 128
          %s1028 = scalar_lea.hbm %s7, %s1027
          %s1029 = sshll.u32 %s1019, 4
          %s1030 = int_to_ptr.vmem [resolvable:$true] %s1029
          %1035 = dma.vmem_to_hbm [thread:$0]  %s1030, 1024, %s1028, %s1016, 128, 128, 8
        $region60: #{tpu_custom_call.1} parent=47 // pred_fallthru
          _
      $region48: #{tpu_custom_call.1} parent=5 // pred_fallthru
        _
      %p1036 = scmp.le.s32.totalorder 2, %s23
      // Predicated region
      $region61: #{tpu_custom_call.1} parent=5 // pred_check
        %p1037 = pneg %p1036
      $region62: #{tpu_custom_call.1} parent=5 // pred_check_branch
        %1039 = sbr.rel (%p1037) target = $region64
      $region63: #{tpu_custom_call.1} parent=5 // pred_region
        %s1040 = ssub.s32 %s23, 2
        // Predicated region
        $region65: #{tpu_custom_call.1} parent=63 // pred_check
          %p1041 = pneg %p204
        $region66: #{tpu_custom_call.1} parent=63 // pred_check_branch
          %1043 = sbr.rel (%p1041) target = $region68
        $region67: #{tpu_custom_call.1} parent=63 // pred_region
          %s1044 = sand.u32 %s189, 1
          %s1045 = scalar_lea.sflag [#allocation6], %s1044
          %s1046 = sand.u32 %s189, 1
          %s1047 = smul.addr %s1046, 64
          %s1048 = scalar_lea.vmem [#allocation9], %s1047
          %1049 = dma.done %s1045, 1024
        $region68: #{tpu_custom_call.1} parent=63 // pred_fallthru
          _
      $region64: #{tpu_custom_call.1} parent=5 // pred_fallthru
        _
    $region6: #{tpu_custom_call.1} parent=1 // loop_footer
      %s27 = sadd.s32 1, %s23
    $region7: #{tpu_custom_call.1} parent=1 // loop_footer_branch
      %22 = sbr.rel target = $region3
    $region8: #{tpu_custom_call.1} parent=1 // loop_exit
      _
    %1050 = vsyncpa [#allocation5], 1
    %s1051 = scalar_lea.sflag [#allocation5], 1
    %1052 = vsyncpa %s1051, 1
    %1053 = vsyncpa [#allocation6], 1
    %s1054 = scalar_lea.sflag [#allocation6], 1
    %1055 = vsyncpa %s1054, 1
    %1056 = vsyncpa [#allocation7], 1
    %s1057 = scalar_lea.sflag [#allocation7], 1
    %1058 = vsyncpa %s1057, 1

</llo_original>
